<compile_context>
chip_gen: v5e
topology: v5e:2x2
jax: 0.10.0
libtpu: 0.0.40
codegen_flags: <defaults>
</compile_context>

<pallas_src>
import functools
import math

import jax
import jax.numpy as jnp
from jax import lax
from jax.experimental import pallas as pl
from jax.experimental.pallas import tpu as pltpu


def _silu(x):
    return x * jax.nn.sigmoid(x)


def _gelu(x):
    # PyTorch ACT2FN["gelu"] is exact-erf GELU.
    return jax.nn.gelu(x, approximate=False)


_ACT2FN = {"silu": _silu, "swish": _silu, "gelu": _gelu}


def _mlp_kernel(x_ref, wg_ref, wu_ref, wdt_ref, o_ref, acc_ref, *, act):
    # x_ref   : (tm, H)  activations
    # wg_ref  : (tn, H)  rows of gate_proj.weight
    # wu_ref  : (tn, H)  rows of up_proj.weight
    # wdt_ref : (tn, H)  rows of down_proj.weight^T (pre-transposed, contiguous)
    # o_ref   : (tm, H)  output tile (resident across the intermediate axis)
    # acc_ref : (tm, H)  f32 accumulator scratch
    j = pl.program_id(1)

    @pl.when(j == 0)
    def _():
        acc_ref[...] = jnp.zeros_like(acc_ref)

    x = x_ref[...]
    # gate/up: contract both operands on their hidden axis (axis 1) -> no
    # transpose relayout; native-dtype MXU matmuls, f32 accumulation.
    dn_nt = (((1,), (1,)), ((), ()))
    g = lax.dot_general(x, wg_ref[...], dn_nt, preferred_element_type=jnp.float32)
    u = lax.dot_general(x, wu_ref[...], dn_nt, preferred_element_type=jnp.float32)
    h = (act(g) * u).astype(x.dtype)                     # (tm, tn)

    # down-projection partial: standard (M,K)x(K,N) against the pre-transposed
    # weight tile.
    dn_mk = (((1,), (0,)), ((), ()))
    acc_ref[...] += lax.dot_general(h, wdt_ref[...], dn_mk,
                                    preferred_element_type=jnp.float32)

    @pl.when(j == pl.num_programs(1) - 1)
    def _():
        o_ref[...] = acc_ref[...].astype(o_ref.dtype)


def _round_up(x, m):
    return ((x + m - 1) // m) * m


def _chip_info():
    """Best-effort (device_kind, vmem_capacity_bytes)."""
    kind = ""
    try:
        kind = jax.devices()[0].device_kind.lower()
    except Exception:
        pass
    vmem_cap = None
    try:
        vmem_cap = int(pltpu.get_tpu_info().vmem_capacity_bytes)
    except Exception:
        pass
    if vmem_cap is None or vmem_cap <= 0:
        vmem_cap = (64 if "v7" in kind else 128) * 1024 * 1024
    return kind, vmem_cap


def _default_tiles(kind):
    # tm ~ FLOP per streamed weight byte; ridge points: v6e ~680, v7x (per TC)
    # ~310, v5e ~240.
    if "v7" in kind:
        return 512, 512
    if "v6" in kind:
        return 1024, 512
    return 512, 512           # v5e / unknown


def mlp(x, gate_w, up_w, down_w, *, hidden_act="silu", tm=None, tn=None):
    """x: (..., hidden); gate_w/up_w: (intermediate, hidden); down_w: (hidden, intermediate)."""
    act = _ACT2FN[hidden_act]
    orig_shape = x.shape
    hidden = orig_shape[-1]
    inter, hidden_g = gate_w.shape
    assert hidden_g == hidden
    assert up_w.shape == (inter, hidden)
    assert down_w.shape == (hidden, inter)

    kind, vmem_cap = _chip_info()
    tm_def, tn_def = _default_tiles(kind)
    tm = tm_def if tm is None else tm
    tn = tn_def if tn is None else tn

    xf = x.reshape(-1, hidden)
    m = xf.shape[0]
    x_item = jnp.dtype(x.dtype).itemsize
    w_items = sum(jnp.dtype(w.dtype).itemsize for w in (gate_w, up_w, down_w))

    # Token tile: 8-aligned, no bigger than the (8-rounded) token count.
    tm = _round_up(min(tm, _round_up(m, 8)), 8)
    # Intermediate tile: 128-aligned, no bigger than the (128-rounded) extent.
    tn = _round_up(min(tn, _round_up(inter, 128)), 128)

    # Honest VMEM estimate: double-buffered activation/output/weight tiles
    # (each with its own itemsize), f32 accumulator, matmul temporaries.
    def est(tm_, tn_):
        return (2 * tm_ * hidden * x_item            # x (double-buffered)
                + 2 * tn_ * hidden * w_items         # 3 weight streams
                + 2 * tm_ * hidden * x_item          # output
                + tm_ * hidden * 4                   # f32 accumulator scratch
                + tm_ * tn_ * (8 + x_item))          # g, u (f32) + h temporaries

    margin = 4 * 1024 * 1024
    budget = int(0.8 * vmem_cap)                     # generation-aware cap
    # Auto-shrink if the tiles would not fit this generation's VMEM budget.
    while est(tm, tn) + margin > budget and tn > 512:
        tn = max(_round_up(tn // 2, 128), 128)
    while est(tm, tn) + margin > budget and tm > 256:
        tm = max(_round_up(tm // 2, 8), 8)

    # v7x megacore: give both TensorCores work when the "parallel" token axis
    # would otherwise have a single tile.  (v5e/v6e have 1 TC: skip.)
    if "v7" in kind and m >= 16 and _round_up(m, tm) // tm == 1:
        tm = max(_round_up(tm // 2, 8), 8)

    m_pad = _round_up(m, tm)
    if m_pad != m:
        xf = jnp.pad(xf, ((0, m_pad - m), (0, 0)))

    # Pre-transpose down_proj.weight to (intermediate, hidden) -> contiguous
    # (tn, H) weight DMAs; zero-pad the intermediate axis to a multiple of tn.
    # TODO(synk): in a real deployment, transpose/pad once at weight-load time.
    down_w_t = down_w.T                              # (inter, hidden)
    inter_pad = _round_up(inter, tn)
    if inter_pad != inter:
        pad = ((0, inter_pad - inter), (0, 0))
        gate_w = jnp.pad(gate_w, pad)
        up_w = jnp.pad(up_w, pad)
        down_w_t = jnp.pad(down_w_t, pad)

    grid = (m_pad // tm, inter_pad // tn)
    vmem_limit = int(min(max(est(tm, tn) + margin, 32 * 1024 * 1024), budget))

    out = pl.pallas_call(
        functools.partial(_mlp_kernel, act=act),
        out_shape=jax.ShapeDtypeStruct((m_pad, hidden), x.dtype),
        grid_spec=pltpu.PrefetchScalarGridSpec(
            num_scalar_prefetch=0,
            grid=grid,
            in_specs=[
                pl.BlockSpec((tm, hidden), lambda i, j: (i, 0)),
                pl.BlockSpec((tn, hidden), lambda i, j: (j, 0)),
                pl.BlockSpec((tn, hidden), lambda i, j: (j, 0)),
                pl.BlockSpec((tn, hidden), lambda i, j: (j, 0)),
            ],
            out_specs=pl.BlockSpec((tm, hidden), lambda i, j: (i, 0)),
            scratch_shapes=[pltpu.VMEM((tm, hidden), jnp.float32)],
        ),
        compiler_params=pltpu.CompilerParams(
            dimension_semantics=("parallel", "arbitrary"),
            vmem_limit_bytes=vmem_limit,
        ),
    )(xf, gate_w, up_w, down_w_t)

    if m_pad != m:
        out = out[:m]
    return out.reshape(orig_shape)


def _init_linear(key, out_features, in_features, dtype=jnp.float32):
    # kaiming_uniform_(a=sqrt(5)) for nn.Linear: bound = 1/sqrt(fan_in)
    bound = math.sqrt(1.0 / in_features)
    return jax.random.uniform(key, (out_features, in_features), dtype=dtype,
                              minval=-bound, maxval=bound)


def _reference(x, gate_w, up_w, down_w, act):
    g = jnp.einsum("bsh,ih->bsi", x, gate_w)
    u = jnp.einsum("bsh,ih->bsi", x, up_w)
    return jnp.einsum("bsi,hi->bsh", act(g) * u, down_w)


if __name__ == "__main__":
    batch, seq, hidden, intermediate = 2, 7, 128, 384   # M=14 exercises padding

    key = jax.random.PRNGKey(0)
    kx, kg, ku, kd = jax.random.split(key, 4)
    x = jax.random.normal(kx, (batch, seq, hidden), dtype=jnp.float32)
    gate_w = _init_linear(kg, intermediate, hidden)
    up_w = _init_linear(ku, intermediate, hidden)
    down_w = _init_linear(kd, hidden, intermediate)

    ref = _reference(x, gate_w, up_w, down_w, _silu)

    # Small tiles -> multi-step grid on both axes (accumulator + padding path).
    out_small = jax.block_until_ready(
        mlp(x, gate_w, up_w, down_w, hidden_act="silu", tm=8, tn=128))
    # Generation-default (large) tiles.
    out_big = jax.block_until_ready(
        mlp(x, gate_w, up_w, down_w, hidden_act="silu"))

    assert out_small.shape == ref.shape and out_big.shape == ref.shape
    assert jnp.allclose(out_small, ref, atol=1e-4, rtol=1e-4), \
        float(jnp.max(jnp.abs(out_small - ref)))
    assert jnp.allclose(out_big, ref, atol=1e-4, rtol=1e-4), \
        float(jnp.max(jnp.abs(out_big - ref)))

    # bf16 serving path (weights + activations in bf16, f32 accumulation).
    xb = x.astype(jnp.bfloat16)
    gb, ub, db = (w.astype(jnp.bfloat16) for w in (gate_w, up_w, down_w))
    out_bf16 = jax.block_until_ready(mlp(xb, gb, ub, db, hidden_act="silu"))
    ref_bf16 = _reference(xb.astype(jnp.float32), gb.astype(jnp.float32),
                          ub.astype(jnp.float32), db.astype(jnp.float32), _silu)
    assert jnp.allclose(out_bf16.astype(jnp.float32), ref_bf16,
                        atol=5e-2, rtol=5e-2), \
        float(jnp.max(jnp.abs(out_bf16.astype(jnp.float32) - ref_bf16)))

    print("KERNEL_OK")
</pallas_src>

<mosaic_0001>
module attributes {stable_mosaic.version = 11 : i64} {
  func.func @_mlp_kernel(%arg0: i32, %arg1: i32, %arg2: memref<8x128xf32, #tpu.memory_space<vmem>>, %arg3: memref<128x128xf32, #tpu.memory_space<vmem>>, %arg4: memref<128x128xf32, #tpu.memory_space<vmem>>, %arg5: memref<128x128xf32, #tpu.memory_space<vmem>>, %arg6: memref<8x128xf32, #tpu.memory_space<vmem>>, %arg7: memref<8x128xf32, #tpu.memory_space<vmem>>) attributes {dimension_semantics = [#tpu.dimension_semantics<parallel>, #tpu.dimension_semantics<arbitrary>], iteration_bounds = array<i64: 2, 3>, scalar_prefetch = 0 : i64, scratch_operands = 1 : i64, tpu.core_type = #tpu.core_type<tc>, window_params = [{transform_indices = @transform_0, window_bounds = array<i64: 8, 128>}, {transform_indices = @transform_1, window_bounds = array<i64: 128, 128>}, {transform_indices = @transform_2, window_bounds = array<i64: 128, 128>}, {transform_indices = @transform_3, window_bounds = array<i64: 128, 128>}, {transform_indices = @transform_4, window_bounds = array<i64: 8, 128>}]} {
    %c0_i32 = arith.constant 0 : i32
    %0 = arith.cmpi eq, %arg1, %c0_i32 : i32
    %1 = arith.extui %0 : i1 to i32
    %c0_i32_0 = arith.constant 0 : i32
    %2 = arith.cmpi ne, %1, %c0_i32_0 : i32
    scf.if %2 {
      %cst_16 = arith.constant 0.000000e+00 : f32
      %23 = vector.broadcast %cst_16 : f32 to vector<8x128xf32>
      %c0_17 = arith.constant 0 : index
      %c0_18 = arith.constant 0 : index
      %24 = vector.load %arg7[%c0_17, %c0_18] : memref<8x128xf32, #tpu.memory_space<vmem>>, vector<8x128xf32>
      tpu.vector_store %arg7[%c0_17, %c0_18], %23 {strides = array<i32>} : memref<8x128xf32, #tpu.memory_space<vmem>>, vector<8x128xf32>,
    } else {
    }
    %c0 = arith.constant 0 : index
    %c0_1 = arith.constant 0 : index
    %3 = vector.load %arg2[%c0, %c0_1] : memref<8x128xf32, #tpu.memory_space<vmem>>, vector<8x128xf32>
    %c0_2 = arith.constant 0 : index
    %c0_3 = arith.constant 0 : index
    %4 = vector.load %arg3[%c0_2, %c0_3] : memref<128x128xf32, #tpu.memory_space<vmem>>, vector<128x128xf32>
    %cst = arith.constant dense<0.000000e+00> : vector<8x128xf32>
    %5 = tpu.matmul %3, %4, %cst {dimension_numbers = #tpu.dot_dimension_numbers<[1], [1], [0], [0], [0, 0, 1, 0], [], []>} : vector<8x128xf32>, vector<128x128xf32>, vector<8x128xf32> -> vector<8x128xf32>
    %c0_4 = arith.constant 0 : index
    %c0_5 = arith.constant 0 : index
    %6 = vector.load %arg4[%c0_4, %c0_5] : memref<128x128xf32, #tpu.memory_space<vmem>>, vector<128x128xf32>
    %cst_6 = arith.constant dense<0.000000e+00> : vector<8x128xf32>
    %7 = tpu.matmul %3, %6, %cst_6 {dimension_numbers = #tpu.dot_dimension_numbers<[1], [1], [0], [0], [0, 0, 1, 0], [], []>} : vector<8x128xf32>, vector<128x128xf32>, vector<8x128xf32> -> vector<8x128xf32>
    %8 = arith.negf %5 : vector<8x128xf32>
    %9 = math.exp %8 : vector<8x128xf32>
    %cst_7 = arith.constant 1.000000e+00 : f32
    %10 = vector.broadcast %cst_7 : f32 to vector<8x128xf32>
    %11 = arith.addf %10, %9 : vector<8x128xf32>
    %12 = arith.divf %10, %11 : vector<8x128xf32>
    %13 = arith.mulf %5, %12 : vector<8x128xf32>
    %14 = arith.mulf %13, %7 : vector<8x128xf32>
    %c0_8 = arith.constant 0 : index
    %c0_9 = arith.constant 0 : index
    %15 = vector.load %arg7[%c0_8, %c0_9] : memref<8x128xf32, #tpu.memory_space<vmem>>, vector<8x128xf32>
    %c0_10 = arith.constant 0 : index
    %c0_11 = arith.constant 0 : index
    %16 = vector.load %arg5[%c0_10, %c0_11] : memref<128x128xf32, #tpu.memory_space<vmem>>, vector<128x128xf32>
    %cst_12 = arith.constant dense<0.000000e+00> : vector<8x128xf32>
    %17 = tpu.matmul %14, %16, %cst_12 {dimension_numbers = #tpu.dot_dimension_numbers<[1], [0], [0], [1], [0, 0, 1, 1], [], []>} : vector<8x128xf32>, vector<128x128xf32>, vector<8x128xf32> -> vector<8x128xf32>
    %18 = arith.addf %15, %17 : vector<8x128xf32>
    %c0_13 = arith.constant 0 : index
    %c0_14 = arith.constant 0 : index
    %19 = vector.load %arg7[%c0_13, %c0_14] : memref<8x128xf32, #tpu.memory_space<vmem>>, vector<8x128xf32>
    tpu.vector_store %arg7[%c0_13, %c0_14], %18 {strides = array<i32>} : memref<8x128xf32, #tpu.memory_space<vmem>>, vector<8x128xf32>,
    %c2_i32 = arith.constant 2 : i32
    %20 = arith.cmpi eq, %arg1, %c2_i32 : i32
    %21 = arith.extui %20 : i1 to i32
    %c0_i32_15 = arith.constant 0 : i32
    %22 = arith.cmpi ne, %21, %c0_i32_15 : i32
    scf.if %22 {
      %c0_16 = arith.constant 0 : index
      %c0_17 = arith.constant 0 : index
      %23 = vector.load %arg7[%c0_16, %c0_17] : memref<8x128xf32, #tpu.memory_space<vmem>>, vector<8x128xf32>
      %c0_18 = arith.constant 0 : index
      %c0_19 = arith.constant 0 : index
      %24 = vector.load %arg6[%c0_18, %c0_19] : memref<8x128xf32, #tpu.memory_space<vmem>>, vector<8x128xf32>
      tpu.vector_store %arg6[%c0_18, %c0_19], %23 {strides = array<i32>} : memref<8x128xf32, #tpu.memory_space<vmem>>, vector<8x128xf32>,
    } else {
    }
    return
  }
  func.func @transform_0(%arg0: i32, %arg1: i32) -> (i32, i32) {
    %c0_i32 = arith.constant 0 : i32
    %c0_i32_0 = arith.constant 0 : i32
    return %arg0, %c0_i32 : i32, i32
  }
  func.func @transform_1(%arg0: i32, %arg1: i32) -> (i32, i32) {
    %c0_i32 = arith.constant 0 : i32
    %c0_i32_0 = arith.constant 0 : i32
    return %arg1, %c0_i32 : i32, i32
  }
  func.func @transform_2(%arg0: i32, %arg1: i32) -> (i32, i32) {
    %c0_i32 = arith.constant 0 : i32
    %c0_i32_0 = arith.constant 0 : i32
    return %arg1, %c0_i32 : i32, i32
  }
  func.func @transform_3(%arg0: i32, %arg1: i32) -> (i32, i32) {
    %c0_i32 = arith.constant 0 : i32
    %c0_i32_0 = arith.constant 0 : i32
    return %arg1, %c0_i32 : i32, i32
  }
  func.func @transform_4(%arg0: i32, %arg1: i32) -> (i32, i32) {
    %c0_i32 = arith.constant 0 : i32
    %c0_i32_0 = arith.constant 0 : i32
    return %arg0, %c0_i32 : i32, i32
  }
}

</mosaic_0001>

<llo_original>
// kernel: tpu_custom_call.1
$region0: #{tpu_custom_call.1}
  #allocation0 [shape = 'u32[]', space=smem, size = 0x4, offset = 0x4, fixed_abs, tag = 'smem constant byte address 0x4 - core index']
  #allocation1 [shape = 'u32[72,128]{1,0:T(1,128)}', space=vmem, size = 0x9000, scoped, tag = 'internal scratch']
  #allocation2 [shape = 'f32[8,128]{1,0:T(8,128)}', space=vmem, size = 0x1000, scoped, tag = 'scratch operand']
  %s0 = inlined_call_operand.hbm [shape: f32[16,128], index: 0, kind: input, shape index: {}]
  %s1 = inlined_call_operand.hbm [shape: f32[384,128], index: 1, kind: input, shape index: {}]
  %s2 = inlined_call_operand.hbm [shape: f32[384,128], index: 2, kind: input, shape index: {}]
  %s3 = inlined_call_operand.hbm [shape: f32[384,128], index: 3, kind: input, shape index: {}]
  %s4 = inlined_call_operand.hbm [shape: f32[16,128], index: 4, kind: output, shape index: {}]
  %s5 = sld [smem:[#allocation0]]
  $region73: #{tpu_custom_call.1} parent=0
    _
  %s7 = ssub.s32 1, %s5
  %s8 = scalar_select 0, %s7, %s5
  $region1: #{tpu_custom_call.1} parent=0
    #allocation3 [shape = 'u8[8192]{0}', space=vmem, size = 0x2000, scoped, tag = 'input window, operand 0']
    #allocation4 [shape = 's32[2]{0}', space=sflag, size = 0x8, scoped, tag = 'scoped memory for tpu_custom_call.1']
    #allocation5 [shape = 's32[2]{0}', space=sflag, size = 0x8, scoped, tag = 'scoped memory for tpu_custom_call.1']
    #allocation6 [shape = 'u8[131072]{0}', space=vmem, size = 0x20000, scoped, tag = 'input window, operand 1']
    #allocation7 [shape = 's32[2]{0}', space=sflag, size = 0x8, scoped, tag = 'scoped memory for tpu_custom_call.1']
    #allocation8 [shape = 'u8[131072]{0}', space=vmem, size = 0x20000, scoped, tag = 'input window, operand 2']
    #allocation9 [shape = 'u8[131072]{0}', space=vmem, size = 0x20000, scoped, tag = 'input window, operand 3']
    #allocation10 [shape = 's32[2]{0}', space=sflag, size = 0x8, scoped, tag = 'scoped memory for tpu_custom_call.1']
    #allocation11 [shape = 'u8[8192]{0}', space=vmem, size = 0x2000, scoped, tag = 'output window, operand 0']
    %9 = vsyncpa [#allocation4], 0
    %s10 = scalar_lea.sflag [#allocation4], 1
    %11 = vsyncpa %s10, 0
    %12 = vsyncpa [#allocation7], 0
    %s13 = scalar_lea.sflag [#allocation7], 1
    %14 = vsyncpa %s13, 0
    %15 = vsyncpa [#allocation10], 0
    %s16 = scalar_lea.sflag [#allocation10], 1
    %17 = vsyncpa %s16, 0
    %18 = vsyncpa [#allocation5], 0
    %s19 = scalar_lea.sflag [#allocation5], 1
    %20 = vsyncpa %s19, 0
    loop: start=0, step=1, limit=8
    $region2: #{tpu_custom_call.1} parent=1 // loop_pre_header
      _
    $region3: #{tpu_custom_call.1} parent=1 // loop_header
      %s22 = sphi 0, %s26
      %p23 = scmp.ge.s32.totalorder %s22, 8
      %s29 = sphi 0, %s41
      %s30 = sphi 0, %s37
      %s31 = sphi 0, %s29
      %s32 = sphi 0, %s30
      %s33 = sphi 0, %s31
      %s34 = sphi 0, %s32
      %s44 = sphi 0, %s46
      %s47 = sphi 0, %s44
      %s48 = sphi 0, %s47
      %s64 = sphi 0, %s48
      %s70 = sphi 0, %s72
      %s73 = sphi 0, %s70
      %s74 = sphi 0, %s73
      %s90 = sphi 0, %s74
      %s96 = sphi 0, %s98
      %s99 = sphi 0, %s96
      %s100 = sphi 0, %s99
      %s116 = sphi 0, %s100
      %s122 = sphi 0, %s124
      %s125 = sphi 0, %s122
      %s126 = sphi 0, %s125
      %s142 = sphi 0, %s126
      %s148 = sphi 0, %s150
      %s151 = sphi 0, %s148
      %s152 = sphi 0, %s151
      %s168 = sphi 0, %s152
    $region4: #{tpu_custom_call.1} parent=1 // loop_header_branch
      %25 = sbr.rel (%p23) target = $region8
    $region5: #{tpu_custom_call.1} parent=1 // loop_body
      %s27 = ssub.s32 %s22, 1
      %s28 = ssub.s32 %s22, 2
      %s35 = sadd.s32 1, %s30
      %p36 = scmp.ge.s32.totalorder %s35, 3
      %s37 = scalar_select %p36, 0, %s35
      %s38 = sadd.s32 1, %s29
      %s39 = scalar_select %p36, %s38, %s29
      %p40 = scmp.ge.s32.totalorder %s39, 2
      %s41 = scalar_select %p40, 0, %s39
      %s42 = ssub.s32 %s29, %s41
      %p43 = scmp.eq.s32.totalorder %s42, 0
      %s45 = sadd.s32 %s44, 1
      %s46 = scalar_select %p43, %s44, %s45
      %p49 = pneg %p43
      %p50 = scmp.eq.s32.totalorder %s22, 5
      %p51 = por %p49, %p50
      %p52 = scmp.ne.s32.totalorder %s44, %s47
      %p53 = scmp.eq.s32.totalorder %s22, 0
      %p54 = por %p52, %p53
      %p55 = scmp.ne.s32.totalorder %s44, %s47
      %p56 = scmp.eq.s32.totalorder %s27, 5
      %p57 = por %p55, %p56
      %p58 = scmp.ne.s32.totalorder %s47, %s48
      %p59 = scmp.eq.s32.totalorder %s27, 0
      %p60 = por %p58, %p59
      %p61 = scmp.ne.s32.totalorder %s47, %s48
      %p62 = scmp.eq.s32.totalorder %s28, 5
      %p63 = por %p61, %p62
      %p65 = scmp.ne.s32.totalorder %s48, %s64
      %p66 = scmp.eq.s32.totalorder %s28, 0
      %p67 = por %p65, %p66
      %s68 = ssub.s32 %s30, %s37
      %p69 = scmp.eq.s32.totalorder %s68, 0
      %s71 = sadd.s32 %s70, 1
      %s72 = scalar_select %p69, %s70, %s71
      %p75 = pneg %p69
      %p76 = scmp.eq.s32.totalorder %s22, 5
      %p77 = por %p75, %p76
      %p78 = scmp.ne.s32.totalorder %s70, %s73
      %p79 = scmp.eq.s32.totalorder %s22, 0
      %p80 = por %p78, %p79
      %p81 = scmp.ne.s32.totalorder %s70, %s73
      %p82 = scmp.eq.s32.totalorder %s27, 5
      %p83 = por %p81, %p82
      %p84 = scmp.ne.s32.totalorder %s73, %s74
      %p85 = scmp.eq.s32.totalorder %s27, 0
      %p86 = por %p84, %p85
      %p87 = scmp.ne.s32.totalorder %s73, %s74
      %p88 = scmp.eq.s32.totalorder %s28, 5
      %p89 = por %p87, %p88
      %p91 = scmp.ne.s32.totalorder %s74, %s90
      %p92 = scmp.eq.s32.totalorder %s28, 0
      %p93 = por %p91, %p92
      %s94 = ssub.s32 %s30, %s37
      %p95 = scmp.eq.s32.totalorder %s94, 0
      %s97 = sadd.s32 %s96, 1
      %s98 = scalar_select %p95, %s96, %s97
      %p101 = pneg %p95
      %p102 = scmp.eq.s32.totalorder %s22, 5
      %p103 = por %p101, %p102
      %p104 = scmp.ne.s32.totalorder %s96, %s99
      %p105 = scmp.eq.s32.totalorder %s22, 0
      %p106 = por %p104, %p105
      %p107 = scmp.ne.s32.totalorder %s96, %s99
      %p108 = scmp.eq.s32.totalorder %s27, 5
      %p109 = por %p107, %p108
      %p110 = scmp.ne.s32.totalorder %s99, %s100
      %p111 = scmp.eq.s32.totalorder %s27, 0
      %p112 = por %p110, %p111
      %p113 = scmp.ne.s32.totalorder %s99, %s100
      %p114 = scmp.eq.s32.totalorder %s28, 5
      %p115 = por %p113, %p114
      %p117 = scmp.ne.s32.totalorder %s100, %s116
      %p118 = scmp.eq.s32.totalorder %s28, 0
      %p119 = por %p117, %p118
      %s120 = ssub.s32 %s30, %s37
      %p121 = scmp.eq.s32.totalorder %s120, 0
      %s123 = sadd.s32 %s122, 1
      %s124 = scalar_select %p121, %s122, %s123
      %p127 = pneg %p121
      %p128 = scmp.eq.s32.totalorder %s22, 5
      %p129 = por %p127, %p128
      %p130 = scmp.ne.s32.totalorder %s122, %s125
      %p131 = scmp.eq.s32.totalorder %s22, 0
      %p132 = por %p130, %p131
      %p133 = scmp.ne.s32.totalorder %s122, %s125
      %p134 = scmp.eq.s32.totalorder %s27, 5
      %p135 = por %p133, %p134
      %p136 = scmp.ne.s32.totalorder %s125, %s126
      %p137 = scmp.eq.s32.totalorder %s27, 0
      %p138 = por %p136, %p137
      %p139 = scmp.ne.s32.totalorder %s125, %s126
      %p140 = scmp.eq.s32.totalorder %s28, 5
      %p141 = por %p139, %p140
      %p143 = scmp.ne.s32.totalorder %s126, %s142
      %p144 = scmp.eq.s32.totalorder %s28, 0
      %p145 = por %p143, %p144
      %s146 = ssub.s32 %s29, %s41
      %p147 = scmp.eq.s32.totalorder %s146, 0
      %s149 = sadd.s32 %s148, 1
      %s150 = scalar_select %p147, %s148, %s149
      %p153 = pneg %p147
      %p154 = scmp.eq.s32.totalorder %s22, 5
      %p155 = por %p153, %p154
      %p156 = scmp.ne.s32.totalorder %s148, %s151
      %p157 = scmp.eq.s32.totalorder %s22, 0
      %p158 = por %p156, %p157
      %p159 = scmp.ne.s32.totalorder %s148, %s151
      %p160 = scmp.eq.s32.totalorder %s27, 5
      %p161 = por %p159, %p160
      %p162 = scmp.ne.s32.totalorder %s151, %s152
      %p163 = scmp.eq.s32.totalorder %s27, 0
      %p164 = por %p162, %p163
      %p165 = scmp.ne.s32.totalorder %s151, %s152
      %p166 = scmp.eq.s32.totalorder %s28, 5
      %p167 = por %p165, %p166
      %p169 = scmp.ne.s32.totalorder %s152, %s168
      %p170 = scmp.eq.s32.totalorder %s28, 0
      %p171 = por %p169, %p170
      %p172 = scmp.le.s32.totalorder 1, %s22
      %p173 = scmp.lt.s32.totalorder %s22, 7
      %p174 = pnand %p172, %p173
      %p175 = pneg %p174
      // Predicated region
      $region9: #{tpu_custom_call.1} parent=5 // pred_check
        _
      $region10: #{tpu_custom_call.1} parent=5 // pred_check_branch
        %177 = sbr.rel (%p174) target = $region12
      $region11: #{tpu_custom_call.1} parent=5 // pred_region
        %s178 = ssub.s32 %s22, 1
      $region12: #{tpu_custom_call.1} parent=5 // pred_fallthru
        _
      %p179 = scmp.lt.s32.totalorder %s22, 6
      // Predicated region
      $region13: #{tpu_custom_call.1} parent=5 // pred_check
        %p180 = pneg %p179
      $region14: #{tpu_custom_call.1} parent=5 // pred_check_branch
        %182 = sbr.rel (%p180) target = $region16
      $region15: #{tpu_custom_call.1} parent=5 // pred_region
        // Predicated region
        $region17: #{tpu_custom_call.1} parent=15 // pred_check
          %p183 = pneg %p54
        $region18: #{tpu_custom_call.1} parent=15 // pred_check_branch
          %185 = sbr.rel (%p183) target = $region20
        $region19: #{tpu_custom_call.1} parent=15 // pred_region
          %s186 = sand.u32 %s44, 1
          %s187 = scalar_lea.sflag [#allocation4], %s186
          %s188 = sand.u32 %s44, 1
          %s189 = smul.addr %s188, 8
          %s190 = scalar_lea.vmem [#allocation3], %s189
          %192 = vsyncadd %s187, 0
          %s193 = smul.addr %s29, 8
          %s194 = scalar_lea.hbm %s0, %s193
          %s196 = sshll.u32 %s194, 4
          %s197 = int_to_ptr.hbm [resolvable:$true] %s196
          %s198 = sshll.u32 %s190, 4
          %s199 = int_to_ptr.vmem [resolvable:$true] %s198
          %201 = dma.hbm_to_vmem [thread:$0]  %s197, 128, %s199, %s187
        $region20: #{tpu_custom_call.1} parent=15 // pred_fallthru
          _
        // Predicated region
        $region21: #{tpu_custom_call.1} parent=15 // pred_check
          %p202 = pneg %p80
        $region22: #{tpu_custom_call.1} parent=15 // pred_check_branch
          %204 = sbr.rel (%p202) target = $region24
        $region23: #{tpu_custom_call.1} parent=15 // pred_region
          %s205 = sand.u32 %s22, 1
          %s206 = scalar_lea.sflag [#allocation7], %s205
          %s207 = sand.u32 %s70, 1
          %s208 = smul.addr %s207, 128
          %s209 = scalar_lea.vmem [#allocation6], %s208
          %s210 = smul.u32 16, %s30
          %212 = vsyncadd %s206, 0
          %s213 = smul.addr %s210, 8
          %s214 = scalar_lea.hbm %s1, %s213
          %s215 = sshll.u32 %s214, 4
          %s216 = int_to_ptr.hbm [resolvable:$true] %s215
          %s217 = sshll.u32 %s209, 4
          %s218 = int_to_ptr.vmem [resolvable:$true] %s217
          %223 = dma.hbm_to_vmem [thread:$0]  %s216, 2048, %s218, %s206, 128, 128, 8
        $region24: #{tpu_custom_call.1} parent=15 // pred_fallthru
          _
        // Predicated region
        $region25: #{tpu_custom_call.1} parent=15 // pred_check
          %p224 = pneg %p106
        $region26: #{tpu_custom_call.1} parent=15 // pred_check_branch
          %226 = sbr.rel (%p224) target = $region28
        $region27: #{tpu_custom_call.1} parent=15 // pred_region
          %s227 = sand.u32 %s22, 1
          %s228 = scalar_lea.sflag [#allocation7], %s227
          %s229 = sand.u32 %s96, 1
          %s230 = smul.addr %s229, 128
          %s231 = scalar_lea.vmem [#allocation8], %s230
          %s232 = smul.u32 16, %s30
          %234 = vsyncadd %s228, 0
          %s235 = smul.addr %s232, 8
          %s236 = scalar_lea.hbm %s2, %s235
          %s237 = sshll.u32 %s236, 4
          %s238 = int_to_ptr.hbm [resolvable:$true] %s237
          %s239 = sshll.u32 %s231, 4
          %s240 = int_to_ptr.vmem [resolvable:$true] %s239
          %245 = dma.hbm_to_vmem [thread:$0]  %s238, 2048, %s240, %s228, 128, 128, 8
        $region28: #{tpu_custom_call.1} parent=15 // pred_fallthru
          _
        // Predicated region
        $region29: #{tpu_custom_call.1} parent=15 // pred_check
          %p246 = pneg %p132
        $region30: #{tpu_custom_call.1} parent=15 // pred_check_branch
          %248 = sbr.rel (%p246) target = $region32
        $region31: #{tpu_custom_call.1} parent=15 // pred_region
          %s249 = sand.u32 %s122, 1
          %s250 = scalar_lea.sflag [#allocation10], %s249
          %s251 = sand.u32 %s122, 1
          %s252 = smul.addr %s251, 128
          %s253 = scalar_lea.vmem [#allocation9], %s252
          %s254 = smul.u32 16, %s30
          %256 = vsyncadd %s250, 0
          %s257 = smul.addr %s254, 8
          %s258 = scalar_lea.hbm %s3, %s257
          %s259 = sshll.u32 %s258, 4
          %s260 = int_to_ptr.hbm [resolvable:$true] %s259
          %s261 = sshll.u32 %s253, 4
          %s262 = int_to_ptr.vmem [resolvable:$true] %s261
          %267 = dma.hbm_to_vmem [thread:$0]  %s260, 2048, %s262, %s250, 128, 128, 8
        $region32: #{tpu_custom_call.1} parent=15 // pred_fallthru
          _
      $region16: #{tpu_custom_call.1} parent=5 // pred_fallthru
        _
      %p268 = scmp.le.s32.totalorder 1, %s22
      %p269 = scmp.lt.s32.totalorder %s22, 7
      %p270 = pnand %p268, %p269
      %p271 = pneg %p270
      // Predicated region
      $region33: #{tpu_custom_call.1} parent=5 // pred_check
        _
      $region34: #{tpu_custom_call.1} parent=5 // pred_check_branch
        %273 = sbr.rel (%p270) target = $region36
      $region35: #{tpu_custom_call.1} parent=5 // pred_region
        %s274 = ssub.s32 %s22, 1
        %s275 = sand.u32 %s47, 1
        %s276 = scalar_lea.sflag [#allocation4], %s275
        %s277 = sand.u32 %s47, 1
        %s278 = smul.addr %s277, 8
        %s279 = scalar_lea.vmem [#allocation3], %s278
        // Predicated region
        $region37: #{tpu_custom_call.1} parent=35 // pred_check
          %p280 = pneg %p60
        $region38: #{tpu_custom_call.1} parent=35 // pred_check_branch
          %282 = sbr.rel (%p280) target = $region40
        $region39: #{tpu_custom_call.1} parent=35 // pred_region
          %284 = dma.done %s276, 128
        $region40: #{tpu_custom_call.1} parent=35 // pred_fallthru
          _
        %s285 = sand.u32 %s27, 1
        %s286 = scalar_lea.sflag [#allocation7], %s285
        %s287 = sand.u32 %s73, 1
        %s288 = smul.addr %s287, 128
        %s289 = scalar_lea.vmem [#allocation6], %s288
        // Predicated region
        $region41: #{tpu_custom_call.1} parent=35 // pred_check
          %p290 = pneg %p86
        $region42: #{tpu_custom_call.1} parent=35 // pred_check_branch
          %292 = sbr.rel (%p290) target = $region44
        $region43: #{tpu_custom_call.1} parent=35 // pred_region
          %294 = dma.done %s286, 2048
        $region44: #{tpu_custom_call.1} parent=35 // pred_fallthru
          _
        %s295 = sand.u32 %s27, 1
        %s296 = scalar_lea.sflag [#allocation7], %s295
        %s297 = sand.u32 %s99, 1
        %s298 = smul.addr %s297, 128
        %s299 = scalar_lea.vmem [#allocation8], %s298
        // Predicated region
        $region45: #{tpu_custom_call.1} parent=35 // pred_check
          %p300 = pneg %p112
        $region46: #{tpu_custom_call.1} parent=35 // pred_check_branch
          %302 = sbr.rel (%p300) target = $region48
        $region47: #{tpu_custom_call.1} parent=35 // pred_region
          %304 = dma.done %s296, 2048
        $region48: #{tpu_custom_call.1} parent=35 // pred_fallthru
          _
        %s305 = sand.u32 %s125, 1
        %s306 = scalar_lea.sflag [#allocation10], %s305
        %s307 = sand.u32 %s125, 1
        %s308 = smul.addr %s307, 128
        %s309 = scalar_lea.vmem [#allocation9], %s308
        // Predicated region
        $region49: #{tpu_custom_call.1} parent=35 // pred_check
          %p310 = pneg %p138
        $region50: #{tpu_custom_call.1} parent=35 // pred_check_branch
          %312 = sbr.rel (%p310) target = $region52
        $region51: #{tpu_custom_call.1} parent=35 // pred_region
          %314 = dma.done %s306, 2048
        $region52: #{tpu_custom_call.1} parent=35 // pred_fallthru
          _
        %s315 = sand.u32 %s47, 1
        %s316 = scalar_lea.sflag [#allocation4], %s315
        %s317 = sand.u32 %s47, 1
        %s318 = smul.addr %s317, 8
        %s319 = scalar_lea.vmem [#allocation3], %s318
        %p320 = pneg %p60
        %p321 = pneg %p57
        %s322 = sand.u32 %s27, 1
        %s323 = scalar_lea.sflag [#allocation7], %s322
        %s324 = sand.u32 %s73, 1
        %s325 = smul.addr %s324, 128
        %s326 = scalar_lea.vmem [#allocation6], %s325
        %p327 = pneg %p86
        %p328 = pneg %p83
        %s329 = sand.u32 %s27, 1
        %s330 = scalar_lea.sflag [#allocation7], %s329
        %s331 = sand.u32 %s99, 1
        %s332 = smul.addr %s331, 128
        %s333 = scalar_lea.vmem [#allocation8], %s332
        %p334 = pneg %p112
        %p335 = pneg %p109
        %s336 = sand.u32 %s125, 1
        %s337 = scalar_lea.sflag [#allocation10], %s336
        %s338 = sand.u32 %s125, 1
        %s339 = smul.addr %s338, 128
        %s340 = scalar_lea.vmem [#allocation9], %s339
        %p341 = pneg %p138
        %p342 = pneg %p135
        %p343 = pneg %p164
        %p344 = pneg %p161
        %s345 = sand.u32 %s151, 1
        %s346 = scalar_lea.sflag [#allocation5], %s345
        %s347 = sand.u32 %s151, 1
        %s348 = smul.addr %s347, 8
        %s349 = scalar_lea.vmem [#allocation11], %s348
        %s350 = smul.u32 16, %s32
        %s351 = smul.u32 16, %s32
        %s352 = smul.u32 16, %s32
        %p353 = scmp.eq.s32.totalorder %s32, 0
        // Predicated region
        $region53: #{tpu_custom_call.1} parent=35 // pred_check
          %p354 = pneg %p353
        $region54: #{tpu_custom_call.1} parent=35 // pred_check_branch
          %356 = sbr.rel (%p354) target = $region56
        $region55: #{tpu_custom_call.1} parent=35 // pred_region
          %357 = vst [vmem:[#allocation2] sm:$0xff] 0.0
        $region56: #{tpu_custom_call.1} parent=35 // pred_fallthru
          _
        %v358 = vld [vmem:[%s279] sm:$0xff]
        %v359 = vld [vmem:[%s289] sm:$0xff]
        %v360 = vld [vmem:[%s289 + $0x8] sm:$0xff]
        %v361 = vld [vmem:[%s289 + $0x10] sm:$0xff]
        %v362 = vld [vmem:[%s289 + $0x18] sm:$0xff]
        %v363 = vld [vmem:[%s289 + $0x20] sm:$0xff]
        %v364 = vld [vmem:[%s289 + $0x28] sm:$0xff]
        %v365 = vld [vmem:[%s289 + $0x30] sm:$0xff]
        %v366 = vld [vmem:[%s289 + $0x38] sm:$0xff]
        %v367 = vld [vmem:[%s289 + $0x40] sm:$0xff]
        %v368 = vld [vmem:[%s289 + $0x48] sm:$0xff]
        %v369 = vld [vmem:[%s289 + $0x50] sm:$0xff]
        %v370 = vld [vmem:[%s289 + $0x58] sm:$0xff]
        %v371 = vld [vmem:[%s289 + $0x60] sm:$0xff]
        %v372 = vld [vmem:[%s289 + $0x68] sm:$0xff]
        %v373 = vld [vmem:[%s289 + $0x70] sm:$0xff]
        %v374 = vld [vmem:[%s289 + $0x78] sm:$0xff]
        %375 = vmatpush.xpose.msra.mxu0 %v374
        %376 = vmatpush.xpose.msra.mxu0 %v373
        %377 = vmatpush.xpose.msra.mxu0 %v372
        %378 = vmatpush.xpose.msra.mxu0 %v371
        %379 = vmatpush.xpose.msra.mxu0 %v370
        %380 = vmatpush.xpose.msra.mxu0 %v369
        %381 = vmatpush.xpose.msra.mxu0 %v368
        %382 = vmatpush.xpose.msra.mxu0 %v367
        %383 = vmatpush.xpose.msra.mxu0 %v366
        %384 = vmatpush.xpose.msra.mxu0 %v365
        %385 = vmatpush.xpose.msra.mxu0 %v364
        %386 = vmatpush.xpose.msra.mxu0 %v363
        %387 = vmatpush.xpose.msra.mxu0 %v362
        %388 = vmatpush.xpose.msra.mxu0 %v361
        %389 = vmatpush.xpose.msra.mxu0 %v360
        %390 = vmatpush.xpose.msra.mxu0 %v359
        %391 = vmatmul.f32.gmra.mxu0 %v358
        %v392 = vpop.f32.mrf.mxu0
        %v393 = vadd.f32 0.0, %v392
        %394 = vdwg.mxu0
        %v395 = vld [vmem:[%s299] sm:$0xff]
        %v396 = vld [vmem:[%s299 + $0x8] sm:$0xff]
        %v397 = vld [vmem:[%s299 + $0x10] sm:$0xff]
        %v398 = vld [vmem:[%s299 + $0x18] sm:$0xff]
        %v399 = vld [vmem:[%s299 + $0x20] sm:$0xff]
        %v400 = vld [vmem:[%s299 + $0x28] sm:$0xff]
        %v401 = vld [vmem:[%s299 + $0x30] sm:$0xff]
        %v402 = vld [vmem:[%s299 + $0x38] sm:$0xff]
        %v403 = vld [vmem:[%s299 + $0x40] sm:$0xff]
        %v404 = vld [vmem:[%s299 + $0x48] sm:$0xff]
        %v405 = vld [vmem:[%s299 + $0x50] sm:$0xff]
        %v406 = vld [vmem:[%s299 + $0x58] sm:$0xff]
        %v407 = vld [vmem:[%s299 + $0x60] sm:$0xff]
        %v408 = vld [vmem:[%s299 + $0x68] sm:$0xff]
        %v409 = vld [vmem:[%s299 + $0x70] sm:$0xff]
        %v410 = vld [vmem:[%s299 + $0x78] sm:$0xff]
        %411 = vmatpush.xpose.msra.mxu0 %v410
        %412 = vmatpush.xpose.msra.mxu0 %v409
        %413 = vmatpush.xpose.msra.mxu0 %v408
        %414 = vmatpush.xpose.msra.mxu0 %v407
        %415 = vmatpush.xpose.msra.mxu0 %v406
        %416 = vmatpush.xpose.msra.mxu0 %v405
        %417 = vmatpush.xpose.msra.mxu0 %v404
        %418 = vmatpush.xpose.msra.mxu0 %v403
        %419 = vmatpush.xpose.msra.mxu0 %v402
        %420 = vmatpush.xpose.msra.mxu0 %v401
        %421 = vmatpush.xpose.msra.mxu0 %v400
        %422 = vmatpush.xpose.msra.mxu0 %v399
        %423 = vmatpush.xpose.msra.mxu0 %v398
        %424 = vmatpush.xpose.msra.mxu0 %v397
        %425 = vmatpush.xpose.msra.mxu0 %v396
        %426 = vmatpush.xpose.msra.mxu0 %v395
        %427 = vmatmul.f32.gmra.mxu0 %v358
        %v428 = vpop.f32.mrf.mxu0
        %v429 = vadd.f32 0.0, %v428
        %430 = vdwg.mxu0
        %v431 = vxor.u32 %v393, 2147483648
        %v432 = vmul.f32 %v431, 1.442695
        %v433 = vpow.pop %v432
        %v434 = vadd.f32 %v433, 1.0
        %v435 = vrcp.pop %v434
        %v436 = vmul.f32 %v434, %v435
        %v437 = vsub.f32 1.0, %v436
        %v438 = vmul.f32 %v435, %v437
        %v439 = vadd.f32 %v435, %v438
        %vm440 = vweird.f32 %v434
        %vm441 = vweird.f32 %v435
        %vm442 = vmor %vm440, %vm441
        %v443 = vsel %vm442, %v435, %v439
        %v444 = vand.u32 2147483647, %v434
        %vm445 = vcmp.eq.f32.partialorder %v444, 8.507059e+37
        %v446 = vand.u32 %v434, 2147483648
        %v447 = vor.u32 1.1754944e-38, %v446
        %v448 = vsel %vm445, %v447, %v443
        %v449 = vmul.f32 1.0, %v448
        %v450 = vmul.f32 %v393, %v449
        %v451 = vmul.f32 %v450, %v429
        %v452 = vld [vmem:[#allocation2] sm:$0xff]
        %v453 = vld [vmem:[%s309] sm:$0xff]
        %v454 = vld [vmem:[%s309 + $0x8] sm:$0xff]
        %v455 = vld [vmem:[%s309 + $0x10] sm:$0xff]
        %v456 = vld [vmem:[%s309 + $0x18] sm:$0xff]
        %v457 = vld [vmem:[%s309 + $0x20] sm:$0xff]
        %v458 = vld [vmem:[%s309 + $0x28] sm:$0xff]
        %v459 = vld [vmem:[%s309 + $0x30] sm:$0xff]
        %v460 = vld [vmem:[%s309 + $0x38] sm:$0xff]
        %v461 = vld [vmem:[%s309 + $0x40] sm:$0xff]
        %v462 = vld [vmem:[%s309 + $0x48] sm:$0xff]
        %v463 = vld [vmem:[%s309 + $0x50] sm:$0xff]
        %v464 = vld [vmem:[%s309 + $0x58] sm:$0xff]
        %v465 = vld [vmem:[%s309 + $0x60] sm:$0xff]
        %v466 = vld [vmem:[%s309 + $0x68] sm:$0xff]
        %v467 = vld [vmem:[%s309 + $0x70] sm:$0xff]
        %v468 = vld [vmem:[%s309 + $0x78] sm:$0xff]
        %469 = vmatpush.msra.mxu0 %v468
        %470 = vmatpush.msra.mxu0 %v467
        %471 = vmatpush.msra.mxu0 %v466
        %472 = vmatpush.msra.mxu0 %v465
        %473 = vmatpush.msra.mxu0 %v464
        %474 = vmatpush.msra.mxu0 %v463
        %475 = vmatpush.msra.mxu0 %v462
        %476 = vmatpush.msra.mxu0 %v461
        %477 = vmatpush.msra.mxu0 %v460
        %478 = vmatpush.msra.mxu0 %v459
        %479 = vmatpush.msra.mxu0 %v458
        %480 = vmatpush.msra.mxu0 %v457
        %481 = vmatpush.msra.mxu0 %v456
        %482 = vmatpush.msra.mxu0 %v455
        %483 = vmatpush.msra.mxu0 %v454
        %484 = vmatpush.msra.mxu0 %v453
        %485 = vmatmul.f32.gmra.mxu0 %v451
        %v486 = vpop.f32.mrf.mxu0
        %v487 = vadd.f32 0.0, %v486
        %488 = vdwg.mxu0
        %v489 = vadd.f32 %v452, %v487
        %490 = vst [vmem:[#allocation2] sm:$0xff] %v489
        %p491 = scmp.eq.s32.totalorder %s32, 2
        // Predicated region
        $region57: #{tpu_custom_call.1} parent=35 // pred_check
          %p492 = pneg %p491
        $region58: #{tpu_custom_call.1} parent=35 // pred_check_branch
          %494 = sbr.rel (%p492) target = $region60
        $region59: #{tpu_custom_call.1} parent=35 // pred_region
          %v495 = vld [vmem:[#allocation2] sm:$0xff]
          %496 = vst [vmem:[%s349] sm:$0xff] %v495
        $region60: #{tpu_custom_call.1} parent=35 // pred_fallthru
          _
        %s497 = sand.u32 %s151, 1
        %s498 = scalar_lea.sflag [#allocation5], %s497
        %s499 = sand.u32 %s151, 1
        %s500 = smul.addr %s499, 8
        %s501 = scalar_lea.vmem [#allocation11], %s500
        // Predicated region
        $region61: #{tpu_custom_call.1} parent=35 // pred_check
          %p502 = pneg %p161
        $region62: #{tpu_custom_call.1} parent=35 // pred_check_branch
          %504 = sbr.rel (%p502) target = $region64
        $region63: #{tpu_custom_call.1} parent=35 // pred_region
          %506 = vsyncadd %s498, 0
          %s507 = smul.addr %s31, 8
          %s508 = scalar_lea.hbm %s4, %s507
          %s510 = sshll.u32 %s501, 4
          %s511 = int_to_ptr.vmem [resolvable:$true] %s510
          %s512 = sshll.u32 %s508, 4
          %s513 = int_to_ptr.hbm [resolvable:$true] %s512
          %515 = dma.vmem_to_hbm [thread:$0]  %s511, 128, %s513, %s498
        $region64: #{tpu_custom_call.1} parent=35 // pred_fallthru
          _
      $region36: #{tpu_custom_call.1} parent=5 // pred_fallthru
        _
      %p516 = scmp.le.s32.totalorder 2, %s22
      // Predicated region
      $region65: #{tpu_custom_call.1} parent=5 // pred_check
        %p517 = pneg %p516
      $region66: #{tpu_custom_call.1} parent=5 // pred_check_branch
        %519 = sbr.rel (%p517) target = $region68
      $region67: #{tpu_custom_call.1} parent=5 // pred_region
        %s520 = ssub.s32 %s22, 2
        // Predicated region
        $region69: #{tpu_custom_call.1} parent=67 // pred_check
          %p521 = pneg %p167
        $region70: #{tpu_custom_call.1} parent=67 // pred_check_branch
          %523 = sbr.rel (%p521) target = $region72
        $region71: #{tpu_custom_call.1} parent=67 // pred_region
          %s524 = sand.u32 %s152, 1
          %s525 = scalar_lea.sflag [#allocation5], %s524
          %s526 = sand.u32 %s152, 1
          %s527 = smul.addr %s526, 8
          %s528 = scalar_lea.vmem [#allocation11], %s527
          %530 = dma.done %s525, 128
        $region72: #{tpu_custom_call.1} parent=67 // pred_fallthru
          _
      $region68: #{tpu_custom_call.1} parent=5 // pred_fallthru
        _
    $region6: #{tpu_custom_call.1} parent=1 // loop_footer
      %s26 = sadd.s32 1, %s22
    $region7: #{tpu_custom_call.1} parent=1 // loop_footer_branch
      %21 = sbr.rel target = $region3
    $region8: #{tpu_custom_call.1} parent=1 // loop_exit
      _
    %531 = vsyncpa [#allocation4], 1
    %s532 = scalar_lea.sflag [#allocation4], 1
    %533 = vsyncpa %s532, 1
    %534 = vsyncpa [#allocation7], 1
    %s535 = scalar_lea.sflag [#allocation7], 1
    %536 = vsyncpa %s535, 1
    %537 = vsyncpa [#allocation10], 1
    %s538 = scalar_lea.sflag [#allocation10], 1
    %539 = vsyncpa %s538, 1
    %540 = vsyncpa [#allocation5], 1
    %s541 = scalar_lea.sflag [#allocation5], 1
    %542 = vsyncpa %s541, 1

</llo_original>
